<compile_context>
chip_gen: v7x
topology: tpu7x:2x2x1
jax: 0.10.0
libtpu: 0.0.40
codegen_flags: <defaults>
</compile_context>

<pallas_src>
import jax
import jax.numpy as jnp
from jax import lax
from jax.experimental import pallas as pl
from jax.experimental.pallas import tpu as pltpu

_MIB = 1024 * 1024


def _physical_vmem_bytes():
    """Per-core VMEM capacity; conservative (v7x-sized) fallback if the query fails."""
    try:
        info = pltpu.get_tpu_info()
        for attr in ("vmem_capacity_bytes", "vmem_bytes", "vmem_size_bytes"):
            v = getattr(info, attr, None)
            if v:
                return int(v)
    except Exception:
        pass
    return 64 * _MIB


def _sublane_pack(itemsize):
    # Sub-32-bit dtypes pack along sublanes: f32 -> 8, bf16 -> 16, int8/fp8 -> 32.
    return {4: 8, 2: 16, 1: 32}.get(int(itemsize), 8)


def _round_up(n, m):
    return ((n + m - 1) // m) * m


def _make_pool_kernel(hw_total, t_hw, needs_mask):
    """Streams (t_r, t_hw) tiles of the flattened (R, HW) input; accumulates f32 row sums."""

    def kernel(x_ref, sum_ref):
        hw = pl.program_id(1)
        last = pl.num_programs(1) - 1

        @pl.when(hw == 0)
        def _init():
            sum_ref[...] = jnp.zeros_like(sum_ref)

        def _accumulate(mask_tail):
            xt = x_ref[...].astype(jnp.float32)
            if mask_tail:
                col = hw * t_hw + lax.broadcasted_iota(jnp.int32, xt.shape, 1)
                xt = jnp.where(col < hw_total, xt, 0.0)
            sum_ref[...] += jnp.sum(xt, axis=-1, keepdims=True)

        if needs_mask:
            # Unmasked fast path on every step except the last partial tile.
            @pl.when(hw < last)
            def _body():
                _accumulate(False)

            @pl.when(hw == last)
            def _tail():
                _accumulate(True)
        else:
            _accumulate(False)

    return kernel


def _make_head_kernel(lr, hw_total, n):
    """Tiny epilogue: pooled sum -> logits -> entropy loss -> analytic grad -> SGD step."""
    lr = float(lr)
    inv_hw = 1.0 / float(hw_total)
    inv_n = 1.0 / float(n)

    def kernel(fsum_ref, w_ref, b_ref, out_ref, wn_ref, bn_ref, loss_ref):
        feats = fsum_ref[...] * inv_hw                 # (N, C) global average pool
        w = w_ref[...]                                 # (K, C)
        b = b_ref[...]                                 # (1, K)

        # outputs = model.predict(x):  feats @ W^T + b  (contract dim 1 of both, no .T relayout)
        logits = lax.dot_general(
            feats, w, (((1,), (1,)), ((), ())),
            preferred_element_type=jnp.float32) + b    # (N, K)

        # softmax_entropy(outputs) = -(softmax * log_softmax).sum(1)   (exact, runs once)
        m = jnp.max(logits, axis=-1, keepdims=True)
        e = jnp.exp(logits - m)
        s = jnp.sum(e, axis=-1, keepdims=True)
        probs = e / s
        log_probs = (logits - m) - jnp.log(s)
        ent = -jnp.sum(probs * log_probs, axis=-1, keepdims=True)      # (N, 1)
        loss_ref[0] = jnp.mean(ent)

        # d(mean entropy)/dlogits = -p * (log p + H) / N
        dlogits = -(probs * (log_probs + ent)) * inv_n                 # (N, K)
        # dW = dlogits^T @ feats  (contract dim 0 of both, no .T relayout)
        dW = lax.dot_general(
            dlogits, feats, (((0,), (0,)), ((), ())),
            preferred_element_type=jnp.float32)                        # (K, C)
        db = jnp.sum(dlogits, axis=0, keepdims=True)                   # (1, K)

        out_ref[...] = logits                  # pre-update logits, like torch forward
        wn_ref[...] = w - lr * dW              # one SGD step on the head
        bn_ref[...] = b - lr * db

    return kernel


def tent_forward_and_adapt(x, w, b, lr=1e-3, t_r=None, t_hw=None):
    """x: (N, C, H, W) NCHW (any float dtype; streamed as-is); w: (K, C); b: (1, K).

    Returns (outputs, w_updated, b_updated, loss) for one Tent adaptation step.
    """
    N, C, H, W_ = x.shape
    K = w.shape[0]
    HW = H * W_
    R = N * C

    x2 = x.reshape(R, HW)                    # free row-major reshape; keep native dtype
    w32 = w.astype(jnp.float32)
    b32 = b.astype(jnp.float32)

    itemsize = jnp.dtype(x.dtype).itemsize
    pack = _sublane_pack(itemsize)

    # Generation-aware VMEM budget: ~96 MiB on 128 MiB parts (v5e/v6e), ~42 MiB on v7x (64 MiB).
    phys_vmem = _physical_vmem_bytes()
    gen_cap = 96 * _MIB if phys_vmem >= 100 * _MIB else 42 * _MIB
    usable = gen_cap - 6 * _MIB
    # Budget per x buffer; keep 2x buffers + the f32 reduce temporary inside the cap.
    tile_budget = min(8 * _MIB, (usable * itemsize) // (2 * itemsize + 4))

    if t_r is None or t_hw is None:
        min_rows = min(R, pack)
        min_row_tile = _round_up(min_rows, pack) * _round_up(HW, 128) * itemsize
        if min_row_tile <= tile_budget:
            # Full HW rows per tile -> fully contiguous DMA; block rows if R is large.
            auto_t_hw = HW
            rows_fit = tile_budget // (_round_up(HW, 128) * itemsize)
            if rows_fit >= R:
                auto_t_r = R
                # Prefer >= 2 row blocks so the "parallel" row axis can use both
                # TensorCores on megacore parts (v7x); costs one extra grid step only.
                if R >= 2 * pack:
                    auto_t_r = _round_up(pl.cdiv(R, 2), pack)
            else:
                auto_t_r = max(pack, (rows_fit // pack) * pack)
        else:
            # A single packed row group exceeds the budget: block the HW axis too.
            auto_t_r = min(R, pack)
            lanes_fit = tile_budget // (_round_up(auto_t_r, pack) * itemsize)
            auto_t_hw = max(128, min((lanes_fit // 128) * 128, (HW // 128) * 128))
        if t_r is None:
            t_r = auto_t_r
        if t_hw is None:
            t_hw = auto_t_hw
    t_r = max(1, min(int(t_r), R))
    t_hw = max(1, min(int(t_hw), HW))

    grid_r = pl.cdiv(R, t_r)
    grid_hw = pl.cdiv(HW, t_hw)
    needs_mask = (HW % t_hw) != 0

    # Dtype-aware VMEM accounting: 2x double-buffered native tiles + f32 reduce temp + accum.
    x_tile_bytes = _round_up(t_r, pack) * _round_up(t_hw, 128) * itemsize
    f32_tmp_bytes = _round_up(t_r, 8) * _round_up(t_hw, 128) * 4
    acc_bytes = _round_up(t_r, 8) * 128 * 4
    vmem_limit = int(min(gen_cap,
                         max(32 * _MIB,
                             2 * x_tile_bytes + f32_tmp_bytes + 2 * acc_bytes + 6 * _MIB)))

    # ---- Phase 1: HBM-bound pooling stream --------------------------------------------------
    pool_kernel = _make_pool_kernel(HW, t_hw, needs_mask)
    pooled = pl.pallas_call(
        pool_kernel,
        grid=(grid_r, grid_hw),
        in_specs=[pl.BlockSpec((t_r, t_hw), lambda r, hw: (r, hw))],
        out_specs=pl.BlockSpec((t_r, 1), lambda r, hw: (r, 0)),
        out_shape=jax.ShapeDtypeStruct((R, 1), jnp.float32),
        compiler_params=pltpu.CompilerParams(
            dimension_semantics=("parallel", "arbitrary"),   # rows shard across TCs; hw reduces
            vmem_limit_bytes=vmem_limit,
        ),
    )(x2)

    feat_sum = pooled.reshape(N, C)          # tiny (N*C) f32 reshape between the two calls

    # ---- Phase 2: tiny head / entropy / grad / SGD epilogue ---------------------------------
    head_kernel = _make_head_kernel(lr, HW, N)
    out_shapes = (
        jax.ShapeDtypeStruct((N, K), jnp.float32),   # outputs (logits)
        jax.ShapeDtypeStruct((K, C), jnp.float32),   # updated W
        jax.ShapeDtypeStruct((1, K), jnp.float32),   # updated b
        jax.ShapeDtypeStruct((1,), jnp.float32),     # entropy loss (SMEM scalar)
    )
    outputs, w_new, b_new, loss = pl.pallas_call(
        head_kernel,
        grid=(1,),
        in_specs=[
            pl.BlockSpec((N, C), lambda i: (0, 0)),
            pl.BlockSpec((K, C), lambda i: (0, 0)),
            pl.BlockSpec((1, K), lambda i: (0, 0)),
        ],
        out_specs=(
            pl.BlockSpec((N, K), lambda i: (0, 0)),
            pl.BlockSpec((K, C), lambda i: (0, 0)),
            pl.BlockSpec((1, K), lambda i: (0, 0)),
            pl.BlockSpec(memory_space=pltpu.MemorySpace.SMEM),
        ),
        out_shape=out_shapes,
        input_output_aliases={1: 1, 2: 2},           # w -> w_updated, b -> b_updated
        compiler_params=pltpu.CompilerParams(
            dimension_semantics=("arbitrary",),
            vmem_limit_bytes=32 * _MIB,
        ),
    )(feat_sum, w32, b32)

    return outputs, w_new, b_new, loss


def tent_forward(x, w, b, steps=1, lr=1e-3, t_r=None, t_hw=None):
    """Tent.forward for steps >= 1 (episodic reset not modeled — see TODO above)."""
    assert steps > 0, "tent requires >= 1 step(s) to forward and update"
    outputs = loss = None
    for _ in range(steps):
        outputs, w, b, loss = tent_forward_and_adapt(x, w, b, lr=lr, t_r=t_r, t_hw=t_hw)
    return outputs, w, b, loss


def _reference(x, w, b, lr, steps=1):
    """Pure-JAX reference of Tent steps on the synthesized pool+linear model."""
    N = x.shape[0]
    feats = jnp.mean(x.astype(jnp.float32).reshape(N, x.shape[1], -1), axis=-1)
    logits = loss = None
    for _ in range(steps):
        logits = feats @ w.T + b
        logp = jax.nn.log_softmax(logits, axis=-1)
        p = jnp.exp(logp)
        ent = -jnp.sum(p * logp, axis=-1)
        loss = jnp.mean(ent)
        dlogits = -(p * (logp + ent[:, None])) / N
        dW = dlogits.T @ feats
        db = jnp.sum(dlogits, axis=0, keepdims=True)
        w = w - lr * dW
        b = b - lr * db
    return logits, w, b, loss


if __name__ == "__main__":
    def _run_case(name, key, shape, dtype, steps=1, t_r=None, t_hw=None):
        N, C, H, W_ = shape
        K = 8
        kx, kw, kb = jax.random.split(key, 3)
        x = (jax.random.normal(kx, (N, C, H, W_), dtype=jnp.float32) * 4.0).astype(dtype)
        w = jax.random.normal(kw, (K, C), dtype=jnp.float32) * 2.0
        b = jax.random.normal(kb, (1, K), dtype=jnp.float32) * 0.1

        # Reference computed first (pre any buffer aliasing/donation).
        r_logits, r_w, r_b, r_loss = _reference(x, w, b, lr=1e-3, steps=steps)

        logits, w_new, b_new, loss = tent_forward(
            x, w, b, steps=steps, lr=1e-3, t_r=t_r, t_hw=t_hw)
        jax.block_until_ready((logits, w_new, b_new, loss))

        ok = (
            bool(jnp.allclose(logits, r_logits, rtol=2e-2, atol=2e-2))
            and bool(jnp.allclose(w_new, r_w, rtol=2e-2, atol=2e-2))
            and bool(jnp.allclose(b_new, r_b, rtol=2e-2, atol=2e-2))
            and bool(jnp.allclose(loss[0], r_loss, rtol=2e-2, atol=2e-2))
        )
        if not ok:
            print("MISMATCH", name, float(loss[0]), float(r_loss))
        return ok

    key = jax.random.PRNGKey(0)
    k1, k2, k3 = jax.random.split(key, 3)
    all_ok = True
    # Multi-step grid on both axes (forced small tiles), two adaptation steps.
    all_ok &= _run_case("f32_tiled", k1, (8, 4, 16, 16), jnp.float32,
                        steps=2, t_r=16, t_hw=128)
    # HW not a multiple of the tile -> exercises the gated masked-tail path.
    all_ok &= _run_case("f32_masked_tail", k2, (4, 6, 18, 18), jnp.float32,
                        steps=1, t_r=8, t_hw=128)
    # Native bf16 streaming with auto-picked tiles (dtype-aware packing path).
    all_ok &= _run_case("bf16_auto", k3, (8, 4, 16, 16), jnp.bfloat16, steps=1)

    if all_ok:
        print("KERNEL_OK")
</pallas_src>

<mosaic_0001>
module attributes {stable_mosaic.version = 11 : i64} {
  func.func @kernel(%arg0: i32, %arg1: i32, %arg2: memref<16x128xf32, #tpu.memory_space<vmem>>, %arg3: memref<16x1xf32, #tpu.memory_space<vmem>>) attributes {dimension_semantics = [#tpu.dimension_semantics<parallel>, #tpu.dimension_semantics<arbitrary>], iteration_bounds = array<i64: 2, 2>, scalar_prefetch = 0 : i64, scratch_operands = 0 : i64, tpu.core_type = #tpu.core_type<tc>, window_params = [{transform_indices = @transform_0, window_bounds = array<i64: 16, 128>}, {transform_indices = @transform_1, window_bounds = array<i64: 16, 1>}]} {
    %c0_i32 = arith.constant 0 : i32
    %0 = arith.cmpi eq, %arg1, %c0_i32 : i32
    %1 = arith.extui %0 : i1 to i32
    %c0_i32_0 = arith.constant 0 : i32
    %2 = arith.cmpi ne, %1, %c0_i32_0 : i32
    scf.if %2 {
      %cst_6 = arith.constant 0.000000e+00 : f32
      %9 = vector.broadcast %cst_6 : f32 to vector<16x1xf32>
      %c0_7 = arith.constant 0 : index
      %c0_8 = arith.constant 0 : index
      %10 = vector.load %arg3[%c0_7, %c0_8] : memref<16x1xf32, #tpu.memory_space<vmem>>, vector<16x1xf32>
      tpu.vector_store %arg3[%c0_7, %c0_8], %9 {strides = array<i32>} : memref<16x1xf32, #tpu.memory_space<vmem>>, vector<16x1xf32>,
    } else {
    }
    %c0 = arith.constant 0 : index
    %c0_1 = arith.constant 0 : index
    %3 = vector.load %arg2[%c0, %c0_1] : memref<16x128xf32, #tpu.memory_space<vmem>>, vector<16x128xf32>
    %c0_2 = arith.constant 0 : index
    %c0_3 = arith.constant 0 : index
    %4 = vector.load %arg3[%c0_2, %c0_3] : memref<16x1xf32, #tpu.memory_space<vmem>>, vector<16x1xf32>
    %cst = arith.constant dense<0.000000e+00> : vector<16xf32>
    %5 = vector.multi_reduction <add>, %3, %cst [1] : vector<16x128xf32> to vector<16xf32>
    %6 = vector.shape_cast %5 : vector<16xf32> to vector<16x1xf32>
    %7 = arith.addf %4, %6 : vector<16x1xf32>
    %c0_4 = arith.constant 0 : index
    %c0_5 = arith.constant 0 : index
    %8 = vector.load %arg3[%c0_4, %c0_5] : memref<16x1xf32, #tpu.memory_space<vmem>>, vector<16x1xf32>
    tpu.vector_store %arg3[%c0_4, %c0_5], %7 {strides = array<i32>} : memref<16x1xf32, #tpu.memory_space<vmem>>, vector<16x1xf32>,
    return
  }
  func.func @transform_0(%arg0: i32, %arg1: i32) -> (i32, i32) {
    %c0_i32 = arith.constant 0 : i32
    return %arg0, %arg1 : i32, i32
  }
  func.func @transform_1(%arg0: i32, %arg1: i32) -> (i32, i32) {
    %c0_i32 = arith.constant 0 : i32
    %c0_i32_0 = arith.constant 0 : i32
    return %arg0, %c0_i32 : i32, i32
  }
}

</mosaic_0001>

<llo_original>
// kernel: tpu_custom_call.1
$region0: #{tpu_custom_call.1}
  #allocation0 [shape = 'u32[]', space=smem, size = 0x4, offset = 0x4, fixed_abs, tag = 'smem constant byte address 0x4 - core index']
  #allocation1 [shape = 'u32[144,128]{1,0:T(1,128)}', space=vmem, size = 0x12000, scoped, tag = 'internal scratch']
  %s0 = inlined_call_operand.hbm [shape: f32[32,256], index: 0, kind: input, shape index: {}]
  %s1 = inlined_call_operand.vmem [shape: f32[32,1], index: 1, kind: output, shape index: {}]
  %s2 = sld [smem:[#allocation0]]
  $region45: #{tpu_custom_call.1} parent=0
    _
  %s4 = ssub.s32 1, %s2
  %s5 = scalar_select 0, %s4, %s2
  $region1: #{tpu_custom_call.1} parent=0
    #allocation2 [shape = 'u8[16384]{0}', space=vmem, size = 0x4000, scoped, tag = 'input window, operand 0']
    #allocation3 [shape = 's32[2]{0}', space=sflag, size = 0x8, scoped, tag = 'scoped memory for tpu_custom_call.1']
    %6 = vsyncpa [#allocation3], 0
    %s7 = scalar_lea.sflag [#allocation3], 1
    %8 = vsyncpa %s7, 0
    loop: start=0, step=1, limit=6
    $region2: #{tpu_custom_call.1} parent=1 // loop_pre_header
      _
    $region3: #{tpu_custom_call.1} parent=1 // loop_header
      %s10 = sphi 0, %s14
      %p11 = scmp.ge.s32.totalorder %s10, 6
      %s17 = sphi 0, %s29
      %s18 = sphi 0, %s25
      %s19 = sphi 0, %s17
      %s20 = sphi 0, %s18
      %s21 = sphi 0, %s19
      %s22 = sphi 0, %s20
      %s34 = sphi 0, %s36
      %s37 = sphi 0, %s34
      %s38 = sphi 0, %s37
      %s54 = sphi 0, %s38
      %s60 = sphi 0, %s62
      %s63 = sphi 0, %s60
      %s64 = sphi 0, %s63
      %s80 = sphi 0, %s64
    $region4: #{tpu_custom_call.1} parent=1 // loop_header_branch
      %13 = sbr.rel (%p11) target = $region8
    $region5: #{tpu_custom_call.1} parent=1 // loop_body
      %s15 = ssub.s32 %s10, 1
      %s16 = ssub.s32 %s10, 2
      %s23 = sadd.s32 1, %s18
      %p24 = scmp.ge.s32.totalorder %s23, 2
      %s25 = scalar_select %p24, 0, %s23
      %s26 = sadd.s32 1, %s17
      %s27 = scalar_select %p24, %s26, %s17
      %p28 = scmp.ge.s32.totalorder %s27, 2
      %s29 = scalar_select %p28, 0, %s27
      %s30 = ssub.s32 %s17, %s29
      %s31 = ssub.s32 %s18, %s25
      %s32 = sor.u32 %s30, %s31
      %p33 = scmp.eq.s32.totalorder %s32, 0
      %s35 = sadd.s32 %s34, 1
      %s36 = scalar_select %p33, %s34, %s35
      %p39 = pneg %p33
      %p40 = scmp.eq.s32.totalorder %s10, 3
      %p41 = por %p39, %p40
      %p42 = scmp.ne.s32.totalorder %s34, %s37
      %p43 = scmp.eq.s32.totalorder %s10, 0
      %p44 = por %p42, %p43
      %p45 = scmp.ne.s32.totalorder %s34, %s37
      %p46 = scmp.eq.s32.totalorder %s15, 3
      %p47 = por %p45, %p46
      %p48 = scmp.ne.s32.totalorder %s37, %s38
      %p49 = scmp.eq.s32.totalorder %s15, 0
      %p50 = por %p48, %p49
      %p51 = scmp.ne.s32.totalorder %s37, %s38
      %p52 = scmp.eq.s32.totalorder %s16, 3
      %p53 = por %p51, %p52
      %p55 = scmp.ne.s32.totalorder %s38, %s54
      %p56 = scmp.eq.s32.totalorder %s16, 0
      %p57 = por %p55, %p56
      %s58 = ssub.s32 %s17, %s29
      %p59 = scmp.eq.s32.totalorder %s58, 0
      %s61 = sadd.s32 %s60, 1
      %s62 = scalar_select %p59, %s60, %s61
      %p65 = pneg %p59
      %p66 = scmp.eq.s32.totalorder %s10, 3
      %p67 = por %p65, %p66
      %p68 = scmp.ne.s32.totalorder %s60, %s63
      %p69 = scmp.eq.s32.totalorder %s10, 0
      %p70 = por %p68, %p69
      %p71 = scmp.ne.s32.totalorder %s60, %s63
      %p72 = scmp.eq.s32.totalorder %s15, 3
      %p73 = por %p71, %p72
      %p74 = scmp.ne.s32.totalorder %s63, %s64
      %p75 = scmp.eq.s32.totalorder %s15, 0
      %p76 = por %p74, %p75
      %p77 = scmp.ne.s32.totalorder %s63, %s64
      %p78 = scmp.eq.s32.totalorder %s16, 3
      %p79 = por %p77, %p78
      %p81 = scmp.ne.s32.totalorder %s64, %s80
      %p82 = scmp.eq.s32.totalorder %s16, 0
      %p83 = por %p81, %p82
      %p84 = scmp.le.s32.totalorder 1, %s10
      %p85 = scmp.lt.s32.totalorder %s10, 5
      %p86 = pnand %p84, %p85
      %p87 = pneg %p86
      // Predicated region
      $region9: #{tpu_custom_call.1} parent=5 // pred_check
        _
      $region10: #{tpu_custom_call.1} parent=5 // pred_check_branch
        %89 = sbr.rel (%p86) target = $region12
      $region11: #{tpu_custom_call.1} parent=5 // pred_region
        %s90 = ssub.s32 %s10, 1
      $region12: #{tpu_custom_call.1} parent=5 // pred_fallthru
        _
      %p91 = scmp.lt.s32.totalorder %s10, 4
      // Predicated region
      $region13: #{tpu_custom_call.1} parent=5 // pred_check
        %p92 = pneg %p91
      $region14: #{tpu_custom_call.1} parent=5 // pred_check_branch
        %94 = sbr.rel (%p92) target = $region16
      $region15: #{tpu_custom_call.1} parent=5 // pred_region
        // Predicated region
        $region17: #{tpu_custom_call.1} parent=15 // pred_check
          %p95 = pneg %p44
        $region18: #{tpu_custom_call.1} parent=15 // pred_check_branch
          %97 = sbr.rel (%p95) target = $region20
        $region19: #{tpu_custom_call.1} parent=15 // pred_region
          %s98 = sand.u32 %s34, 1
          %s99 = scalar_lea.sflag [#allocation3], %s98
          %s100 = sand.u32 %s34, 1
          %s101 = smul.addr %s100, 16
          %s102 = scalar_lea.vmem [#allocation2], %s101
          %s103 = smul.u32 2, %s17
          %s105 = ssub.s32 256, 256
          %106 = vsyncadd %s99, %s105
          %s107 = smul.addr %s103, 2
          %s108 = sadd.s32 %s18, %s107
          %s109 = smul.addr %s108, 128
          %s110 = scalar_lea.hbm %s0, %s109
          %s111 = sshll.u32 %s102, 4
          %s112 = int_to_ptr.vmem [resolvable:$true] %s111
          %117 = dma.hbm_to_vmem [thread:$0]  %s110, 256, %s112, %s99, 256, 128, 8
        $region20: #{tpu_custom_call.1} parent=15 // pred_fallthru
          _
      $region16: #{tpu_custom_call.1} parent=5 // pred_fallthru
        _
      %p118 = scmp.le.s32.totalorder 1, %s10
      %p119 = scmp.lt.s32.totalorder %s10, 5
      %p120 = pnand %p118, %p119
      %p121 = pneg %p120
      // Predicated region
      $region21: #{tpu_custom_call.1} parent=5 // pred_check
        _
      $region22: #{tpu_custom_call.1} parent=5 // pred_check_branch
        %123 = sbr.rel (%p120) target = $region24
      $region23: #{tpu_custom_call.1} parent=5 // pred_region
        %s124 = ssub.s32 %s10, 1
        %s125 = sand.u32 %s37, 1
        %s126 = scalar_lea.sflag [#allocation3], %s125
        %s127 = sand.u32 %s37, 1
        %s128 = smul.addr %s127, 16
        %s129 = scalar_lea.vmem [#allocation2], %s128
        // Predicated region
        $region25: #{tpu_custom_call.1} parent=23 // pred_check
          %p130 = pneg %p50
        $region26: #{tpu_custom_call.1} parent=23 // pred_check_branch
          %132 = sbr.rel (%p130) target = $region28
        $region27: #{tpu_custom_call.1} parent=23 // pred_region
          %133 = dma.done %s126, 256
        $region28: #{tpu_custom_call.1} parent=23 // pred_fallthru
          _
        %s134 = sand.u32 %s37, 1
        %s135 = scalar_lea.sflag [#allocation3], %s134
        %s136 = sand.u32 %s37, 1
        %s137 = smul.addr %s136, 16
        %s138 = scalar_lea.vmem [#allocation2], %s137
        %p139 = pneg %p50
        %p140 = pneg %p47
        %p141 = pneg %p76
        %p142 = pneg %p73
        %s143 = smul.u32 2, %s19
        %p144 = scmp.lt.s32.totalorder %s143, 3
        %s145 = scalar_select %p144, %s143, 3
        %s146 = smul.addr %s145, 8
        %s147 = scalar_lea.vmem %s1, %s146
        %s148 = smul.u32 2, %s19
        %s149 = smul.u32 2, %s19
        %p150 = scmp.lt.s32.totalorder %s149, 3
        %s151 = scalar_select %p150, %s149, 3
        %s152 = smul.addr %s151, 8
        %s153 = scalar_lea.vmem %s1, %s152
        %s154 = smul.u32 2, %s19
        %p155 = scmp.eq.s32.totalorder %s20, 0
        // Predicated region
        $region29: #{tpu_custom_call.1} parent=23 // pred_check
          %p156 = pneg %p155
        $region30: #{tpu_custom_call.1} parent=23 // pred_check_branch
          %158 = sbr.rel (%p156) target = $region32
        $region31: #{tpu_custom_call.1} parent=23 // pred_region
          %vm159 = vcmask 7168
          %160 = vst.msk [vmem:[%s153] sm:$0xff] %vm159, 0.0
          %161 = vst.msk [vmem:[%s153 + $0x8] sm:$0xff] %vm159, 0.0
        $region32: #{tpu_custom_call.1} parent=23 // pred_fallthru
          _
        %v162 = vld [vmem:[%s129] sm:$0xff]
        %v163 = vld [vmem:[%s129 + $0x8] sm:$0xff]
        %v164 = vld [vmem:[%s153] sm:$0xff]
        %v165 = vld [vmem:[%s153 + $0x8] sm:$0xff]
        %166 = vadd.xlane.f32.xlu0 %v162
        %v167 = vpop.xlane.xlu0 %166
        %168 = vadd.xlane.f32.xlu0 %v163
        %v169 = vpop.xlane.xlu0 %168
        %v170 = vadd.f32 %v164, %v167
        %v171 = vadd.f32 %v165, %v169
        %vm172 = vcmask 7168
        %173 = vst.msk [vmem:[%s153] sm:$0xff] %vm172, %v170
        %174 = vst.msk [vmem:[%s153 + $0x8] sm:$0xff] %vm172, %v171
        %s175 = smul.u32 2, %s19
        %p176 = scmp.lt.s32.totalorder %s175, 3
        %s177 = scalar_select %p176, %s175, 3
        %s178 = smul.addr %s177, 8
        %s179 = scalar_lea.vmem %s1, %s178
        // Predicated region
        $region33: #{tpu_custom_call.1} parent=23 // pred_check
          %p180 = pneg %p73
        $region34: #{tpu_custom_call.1} parent=23 // pred_check_branch
          %182 = sbr.rel (%p180) target = $region36
        $region35: #{tpu_custom_call.1} parent=23 // pred_region
          %s183 = smul.u32 2, %s19
        $region36: #{tpu_custom_call.1} parent=23 // pred_fallthru
          _
      $region24: #{tpu_custom_call.1} parent=5 // pred_fallthru
        _
      %p184 = scmp.le.s32.totalorder 2, %s10
      // Predicated region
      $region37: #{tpu_custom_call.1} parent=5 // pred_check
        %p185 = pneg %p184
      $region38: #{tpu_custom_call.1} parent=5 // pred_check_branch
        %187 = sbr.rel (%p185) target = $region40
      $region39: #{tpu_custom_call.1} parent=5 // pred_region
        %s188 = ssub.s32 %s10, 2
        // Predicated region
        $region41: #{tpu_custom_call.1} parent=39 // pred_check
          %p189 = pneg %p79
        $region42: #{tpu_custom_call.1} parent=39 // pred_check_branch
          %191 = sbr.rel (%p189) target = $region44
        $region43: #{tpu_custom_call.1} parent=39 // pred_region
          %s192 = smul.u32 2, %s21
          %p193 = scmp.lt.s32.totalorder %s192, 3
          %s194 = scalar_select %p193, %s192, 3
          %s195 = smul.addr %s194, 8
          %s196 = scalar_lea.vmem %s1, %s195
        $region44: #{tpu_custom_call.1} parent=39 // pred_fallthru
          _
      $region40: #{tpu_custom_call.1} parent=5 // pred_fallthru
        _
    $region6: #{tpu_custom_call.1} parent=1 // loop_footer
      %s14 = sadd.s32 1, %s10
    $region7: #{tpu_custom_call.1} parent=1 // loop_footer_branch
      %9 = sbr.rel target = $region3
    $region8: #{tpu_custom_call.1} parent=1 // loop_exit
      _
    %197 = vsyncpa [#allocation3], 1
    %s198 = scalar_lea.sflag [#allocation3], 1
    %199 = vsyncpa %s198, 1

</llo_original>
